<compile_context>
chip_gen: v5e
topology: v5e:2x2
jax: 0.10.0
libtpu: 0.0.40
codegen_flags: <defaults>
</compile_context>

<pallas_src>
import functools

import jax
import jax.numpy as jnp
from jax.experimental import pallas as pl
from jax.experimental.pallas import tpu as pltpu


_NEG_BIG = -1e30  # stands in for -inf in the padded class lanes


def _round_up(v, m):
    return -(-v // m) * m


# ----------------------------------------------------------------------------
# One GCN layer as a row-parallel Pallas kernel:
#     out_rows = act( (A_hat[rows, :] @ X) @ W + b )
# act = leaky_relu for the hidden layer, row-wise log_softmax for the final
# layer.  Each row block is fully independent (no cross-block recomputation),
# so the single grid axis is "parallel".
# ----------------------------------------------------------------------------
def _gcn_layer_kernel(a_ref, x_ref, w_ref, b_ref, out_ref, *, leaky, final):
    # A row block (tm, Np) @ full features (Np, Fin): bf16 MXU, f32 accumulate.
    ax = jnp.dot(a_ref[...], x_ref[...], preferred_element_type=jnp.float32)
    z = jnp.dot(ax.astype(jnp.bfloat16), w_ref[...],
                preferred_element_type=jnp.float32)
    z = z + b_ref[...]          # f32 bias (padded class lanes carry -1e30)

    if final:
        # log_softmax over the class axis.  Padded lanes hold ~-1e30: they never
        # win the max and exp() underflows to 0, so the lse over the padded row
        # equals the lse over the real classes.
        m = jnp.max(z, axis=1, keepdims=True)
        lse = jnp.log(jnp.sum(jnp.exp(z - m), axis=1, keepdims=True)) + m
        out_ref[...] = (z - lse).astype(out_ref.dtype)
    else:
        # leaky_relu(negative_slope=leaky) as a single vmax (mul+max instead of
        # mul+cmp+select).
        z = jnp.maximum(z, leaky * z)
        out_ref[...] = z.astype(out_ref.dtype)


def _gcn_layer_call(a_bf, x_bf, w_bf, b_f32, *, out_dtype, leaky, final, tm):
    n_pad = a_bf.shape[0]
    fin = x_bf.shape[1]
    fout = w_bf.shape[1]
    grid = (n_pad // tm,)
    out_itemsize = 2 if out_dtype == jnp.bfloat16 else 4

    # Advisory cost for XLA's scheduler around the custom call.
    flops = 2 * n_pad * n_pad * fin + 2 * n_pad * fin * fout
    transcendentals = n_pad * (fout + 1) if final else 0
    bytes_accessed = (a_bf.size * 2 + x_bf.size * 2 + w_bf.size * 2
                      + b_f32.size * 4 + n_pad * fout * out_itemsize)

    # Scoped-VMEM budget from the padded buffers (double-buffered blocks) plus
    # intermediate headroom; default scoped limit (16/32 MiB) is far below what
    # the dense whole-row-resident form can legitimately use.
    vmem_need = int(1.5 * (
        2 * tm * n_pad * 2            # A row block, double buffered
        + 2 * n_pad * fin * 2         # dense feature matrix (conservative x2)
        + 2 * fin * fout * 2          # weights
        + 2 * 8 * fout * 4            # bias tile
        + 2 * tm * fout * 4           # output block (f32 upper bound)
        + 4 * tm * max(fin, fout) * 4 # f32/bf16 intermediates headroom
    ))
    vmem_limit = min(max(vmem_need, 8 * 1024 * 1024), 127 * 1024 * 1024)

    return pl.pallas_call(
        functools.partial(_gcn_layer_kernel, leaky=leaky, final=final),
        out_shape=jax.ShapeDtypeStruct((n_pad, fout), out_dtype),
        grid=grid,
        in_specs=[
            pl.BlockSpec((tm, n_pad), lambda i: (i, 0)),   # A_hat row block
            pl.BlockSpec((n_pad, fin), lambda i: (0, 0)),  # full X / H (reused)
            pl.BlockSpec((fin, fout), lambda i: (0, 0)),   # W (reused)
            pl.BlockSpec((1, fout), lambda i: (0, 0)),     # bias (reused)
        ],
        out_specs=pl.BlockSpec((tm, fout), lambda i: (i, 0)),
        compiler_params=pltpu.CompilerParams(
            dimension_semantics=("parallel",),
            vmem_limit_bytes=vmem_limit),
        cost_estimate=pl.CostEstimate(flops=flops,
                                      transcendentals=transcendentals,
                                      bytes_accessed=bytes_accessed),
    )(a_bf, x_bf, w_bf, b_f32)


def rpggcn_forward(a_hat, x, w1, b1, w2, b2, *, leaky=0.01):
    n, f = x.shape
    hid = w1.shape[1]
    c = w2.shape[1]

    # Lane/sublane-dense padding: every minor-most dim a multiple of 128 and the
    # node count a multiple of 128 (bf16 packs (16,128) tiles).
    n_pad = max(_round_up(n, 128), 128)
    f_pad = max(_round_up(f, 128), 128)
    hid_pad = max(_round_up(hid, 128), 128)
    c_pad = max(_round_up(c, 128), 128)

    # Zero-pad nodes/features/hidden; pad class columns with zero weights and a
    # -1e30 bias so the padded logits behave like -inf in the row log_softmax.
    a_p = jnp.zeros((n_pad, n_pad), jnp.float32).at[:n, :n].set(a_hat)
    x_p = jnp.zeros((n_pad, f_pad), jnp.float32).at[:n, :f].set(x)
    w1_p = jnp.zeros((f_pad, hid_pad), jnp.float32).at[:f, :hid].set(w1)
    b1_p = jnp.zeros((1, hid_pad), jnp.float32).at[:, :hid].set(b1)
    w2_p = jnp.zeros((hid_pad, c_pad), jnp.float32).at[:hid, :c].set(w2)
    b2_p = jnp.full((1, c_pad), _NEG_BIG, jnp.float32).at[:, :c].set(b2)

    # bf16 operands for the MXU (f32 accumulation inside the kernel).
    a_bf = a_p.astype(jnp.bfloat16)
    x_bf = x_p.astype(jnp.bfloat16)
    w1_bf = w1_p.astype(jnp.bfloat16)
    w2_bf = w2_p.astype(jnp.bfloat16)

    # Row-block size: whole problem if it fits one block, otherwise 128-multiple
    # blocks so >=2 blocks exist and v7x's 2 TensorCores split the rows.
    if n_pad <= 128:
        tm = n_pad
    else:
        tm = next(t for t in (512, 256, 128)
                  if n_pad % t == 0 and n_pad // t >= 2)

    # ---- GCNConv 1 + leaky_relu: H = leaky_relu((A @ X) @ W1 + b1) ----
    h_bf = _gcn_layer_call(a_bf, x_bf, w1_bf, b1_p, out_dtype=jnp.bfloat16,
                           leaky=leaky, final=False, tm=tm)

    # ---- dropout(p=0.5, training=self.training) ----
    # TODO(synk): training-mode dropout (pltpu.prng_seed + prng_random_bits
    # mask) not wired in; inference-mode forward treats it as identity.

    # ---- GCNConv 2 + log_softmax: log_softmax((A @ H) @ W2 + b2, axis=1) ----
    z = _gcn_layer_call(a_bf, h_bf, w2_bf, b2_p, out_dtype=jnp.float32,
                        leaky=leaky, final=True, tm=tm)
    return z[:n, :c]


# ----------------------------------------------------------------------------
# Plain-JAX glue: build the GCN-normalized dense adjacency from edge_index.
#   A_hat = D^{-1/2} (A + I) D^{-1/2},  A[dst, src] = 1 for each edge src->dst
# ----------------------------------------------------------------------------
def build_norm_adj(edge_index, num_nodes):
    src, dst = edge_index[0], edge_index[1]
    a = jnp.zeros((num_nodes, num_nodes), jnp.float32)
    a = a.at[dst, src].max(1.0)                       # dense A (dedup'd)
    a = a + jnp.eye(num_nodes, dtype=jnp.float32)     # add self loops
    deg = jnp.sum(a, axis=1)
    d_inv_sqrt = jnp.where(deg > 0, 1.0 / jnp.sqrt(deg), 0.0)
    return a * d_inv_sqrt[:, None] * d_inv_sqrt[None, :]


# Pure-JAX references for correctness checks.
def _reference_f32(a_hat, x, w1, b1, w2, b2, leaky=0.01):
    h = (a_hat @ x) @ w1 + b1
    h = jnp.maximum(h, leaky * h)
    z = (a_hat @ h) @ w2 + b2
    return jax.nn.log_softmax(z, axis=1)


def _reference_bf16(a_hat, x, w1, b1, w2, b2, leaky=0.01):
    # Mirrors the kernel's bf16-input / f32-accumulate arithmetic and the
    # (A @ X) @ W association.
    a = a_hat.astype(jnp.bfloat16)
    ax = jnp.dot(a, x.astype(jnp.bfloat16), preferred_element_type=jnp.float32)
    h = jnp.dot(ax.astype(jnp.bfloat16), w1.astype(jnp.bfloat16),
                preferred_element_type=jnp.float32) + b1
    h = jnp.maximum(h, leaky * h)
    ah = jnp.dot(a, h.astype(jnp.bfloat16), preferred_element_type=jnp.float32)
    z = jnp.dot(ah.astype(jnp.bfloat16), w2.astype(jnp.bfloat16),
                preferred_element_type=jnp.float32) + b2
    return jax.nn.log_softmax(z, axis=1)


if __name__ == "__main__":
    LEAKY = 0.01

    def make_problem(key, n, feat, hid, cls, e):
        kx, ke, kw1, kw2 = jax.random.split(key, 4)
        x = jax.random.normal(kx, (n, feat), dtype=jnp.float32)
        # Random undirected edge set (both directions included).
        src = jax.random.randint(ke, (e,), 0, n)
        dst = jax.random.randint(jax.random.fold_in(ke, 1), (e,), 0, n)
        edge_index = jnp.stack(
            [jnp.concatenate([src, dst]), jnp.concatenate([dst, src])], axis=0)
        # Deterministic Glorot-style weight init (GCNConv has weight + bias).
        w1 = jax.random.normal(kw1, (feat, hid), jnp.float32) / jnp.sqrt(feat)
        b1 = jnp.zeros((1, hid), jnp.float32)
        w2 = jax.random.normal(kw2, (hid, cls), jnp.float32) / jnp.sqrt(hid)
        b2 = jnp.zeros((1, cls), jnp.float32)
        a_hat = build_norm_adj(edge_index, n)
        return a_hat, x, w1, b1, w2, b2

    key = jax.random.PRNGKey(0)

    # (1) Tiny problem (N=16, F=32, HID=32, C=8): single row block, grid=(1,).
    a_hat, x, w1, b1, w2, b2 = make_problem(key, 16, 32, 32, 8, 48)
    out = jax.block_until_ready(
        rpggcn_forward(a_hat, x, w1, b1, w2, b2, leaky=LEAKY))
    assert out.shape == (16, 8)

    ref_bf16 = _reference_bf16(a_hat, x, w1, b1, w2, b2, leaky=LEAKY)
    assert jnp.allclose(out, ref_bf16, atol=5e-3, rtol=5e-3), \
        "mismatch vs bf16-matched reference (small problem)"
    ref_f32 = _reference_f32(a_hat, x, w1, b1, w2, b2, leaky=LEAKY)
    assert jnp.allclose(out, ref_f32, atol=2e-1, rtol=2e-1), \
        "mismatch vs f32 reference beyond bf16 tolerance (small problem)"

    # (2) Larger problem (N=200 -> n_pad=256, grid=(2,)): exercises the
    #     row-parallel multi-block path (both v7x TensorCores for real sizes).
    a_hat2, x2, w12, b12, w22, b22 = make_problem(
        jax.random.fold_in(key, 7), 200, 48, 64, 10, 600)
    out2 = jax.block_until_ready(
        rpggcn_forward(a_hat2, x2, w12, b12, w22, b22, leaky=LEAKY))
    assert out2.shape == (200, 10)
    ref2 = _reference_bf16(a_hat2, x2, w12, b12, w22, b22, leaky=LEAKY)
    assert jnp.allclose(out2, ref2, atol=1e-2, rtol=1e-2), \
        "mismatch vs bf16-matched reference (multi-block problem)"

    print("KERNEL_OK")
</pallas_src>

<mosaic_0001>
module attributes {stable_mosaic.version = 11 : i64} {
  func.func @_gcn_layer_kernel(%arg0: i32, %arg1: memref<128x128xbf16, #tpu.memory_space<vmem>>, %arg2: memref<128x128xbf16, #tpu.memory_space<vmem>>, %arg3: memref<128x128xbf16, #tpu.memory_space<vmem>>, %arg4: memref<1x128xf32, #tpu.memory_space<vmem>>, %arg5: memref<128x128xbf16, #tpu.memory_space<vmem>>) attributes {dimension_semantics = [#tpu.dimension_semantics<parallel>], iteration_bounds = array<i64: 1>, scalar_prefetch = 0 : i64, scratch_operands = 0 : i64, tpu.core_type = #tpu.core_type<tc>, window_params = [{transform_indices = @transform_0, window_bounds = array<i64: 128, 128>}, {pipeline_mode = #tpu.pipeline_mode<synchronous>, transform_indices = @transform_1, window_bounds = array<i64: 128, 128>}, {pipeline_mode = #tpu.pipeline_mode<synchronous>, transform_indices = @transform_2, window_bounds = array<i64: 128, 128>}, {pipeline_mode = #tpu.pipeline_mode<synchronous>, transform_indices = @transform_3, window_bounds = array<i64: 1, 128>}, {transform_indices = @transform_4, window_bounds = array<i64: 128, 128>}]} {
    %c0 = arith.constant 0 : index
    %c0_0 = arith.constant 0 : index
    %0 = vector.load %arg1[%c0, %c0_0] : memref<128x128xbf16, #tpu.memory_space<vmem>>, vector<128x128xbf16>
    %c0_1 = arith.constant 0 : index
    %c0_2 = arith.constant 0 : index
    %1 = vector.load %arg2[%c0_1, %c0_2] : memref<128x128xbf16, #tpu.memory_space<vmem>>, vector<128x128xbf16>
    %cst = arith.constant dense<0.000000e+00> : vector<128x128xf32>
    %2 = tpu.matmul %0, %1, %cst {dimension_numbers = #tpu.dot_dimension_numbers<[1], [0], [0], [1], [0, 0, 1, 1], [], []>} : vector<128x128xbf16>, vector<128x128xbf16>, vector<128x128xf32> -> vector<128x128xf32>
    %3 = arith.truncf %2 : vector<128x128xf32> to vector<128x128xbf16>
    %c0_3 = arith.constant 0 : index
    %c0_4 = arith.constant 0 : index
    %4 = vector.load %arg3[%c0_3, %c0_4] : memref<128x128xbf16, #tpu.memory_space<vmem>>, vector<128x128xbf16>
    %cst_5 = arith.constant dense<0.000000e+00> : vector<128x128xf32>
    %5 = tpu.matmul %3, %4, %cst_5 {dimension_numbers = #tpu.dot_dimension_numbers<[1], [0], [0], [1], [0, 0, 1, 1], [], []>} : vector<128x128xbf16>, vector<128x128xbf16>, vector<128x128xf32> -> vector<128x128xf32>
    %c0_6 = arith.constant 0 : index
    %c0_7 = arith.constant 0 : index
    %6 = vector.load %arg4[%c0_6, %c0_7] : memref<1x128xf32, #tpu.memory_space<vmem>>, vector<1x128xf32>
    %7 = vector.broadcast %6 : vector<1x128xf32> to vector<128x128xf32>
    %8 = arith.addf %5, %7 : vector<128x128xf32>
    %cst_8 = arith.constant 0.00999999977 : f32
    %9 = vector.broadcast %cst_8 : f32 to vector<128x128xf32>
    %10 = arith.mulf %9, %8 : vector<128x128xf32>
    %11 = arith.maximumf %8, %10 : vector<128x128xf32>
    %12 = arith.truncf %11 : vector<128x128xf32> to vector<128x128xbf16>
    %c0_9 = arith.constant 0 : index
    %c0_10 = arith.constant 0 : index
    %13 = vector.load %arg5[%c0_9, %c0_10] : memref<128x128xbf16, #tpu.memory_space<vmem>>, vector<128x128xbf16>
    tpu.vector_store %arg5[%c0_9, %c0_10], %12 {strides = array<i32>} : memref<128x128xbf16, #tpu.memory_space<vmem>>, vector<128x128xbf16>,
    return
  }
  func.func @transform_0(%arg0: i32) -> (i32, i32) {
    %c0_i32 = arith.constant 0 : i32
    %c0_i32_0 = arith.constant 0 : i32
    return %arg0, %c0_i32 : i32, i32
  }
  func.func @transform_1(%arg0: i32) -> (i32, i32) {
    %c0_i32 = arith.constant 0 : i32
    %c0_i32_0 = arith.constant 0 : i32
    %c0_i32_1 = arith.constant 0 : i32
    return %c0_i32, %c0_i32_0 : i32, i32
  }
  func.func @transform_2(%arg0: i32) -> (i32, i32) {
    %c0_i32 = arith.constant 0 : i32
    %c0_i32_0 = arith.constant 0 : i32
    %c0_i32_1 = arith.constant 0 : i32
    return %c0_i32, %c0_i32_0 : i32, i32
  }
  func.func @transform_3(%arg0: i32) -> (i32, i32) {
    %c0_i32 = arith.constant 0 : i32
    %c0_i32_0 = arith.constant 0 : i32
    %c0_i32_1 = arith.constant 0 : i32
    return %c0_i32, %c0_i32_0 : i32, i32
  }
  func.func @transform_4(%arg0: i32) -> (i32, i32) {
    %c0_i32 = arith.constant 0 : i32
    %c0_i32_0 = arith.constant 0 : i32
    return %arg0, %c0_i32 : i32, i32
  }
}

</mosaic_0001>

<llo_original>
// kernel: tpu_custom_call.1
$region0: #{tpu_custom_call.1}
  #allocation0 [shape = 'u32[]', space=smem, size = 0x4, offset = 0x4, fixed_abs, tag = 'smem constant byte address 0x4 - core index']
  #allocation1 [shape = 'u32[72,128]{1,0:T(1,128)}', space=vmem, size = 0x9000, scoped, tag = 'internal scratch']
  %s0 = inlined_call_operand.hbm [shape: bf16[128,128], index: 0, kind: input, shape index: {}]
  %s1 = inlined_call_operand.hbm [shape: bf16[128,128], index: 1, kind: input, shape index: {}]
  %s2 = inlined_call_operand.hbm [shape: bf16[128,128], index: 2, kind: input, shape index: {}]
  %s3 = inlined_call_operand.vmem [shape: f32[1,128], index: 3, kind: input, shape index: {}]
  %s4 = inlined_call_operand.hbm [shape: bf16[128,128], index: 4, kind: output, shape index: {}]
  %s5 = sld [smem:[#allocation0]]
  $region38: #{tpu_custom_call.1} parent=0
    _
  %s7 = ssub.s32 1, %s5
  %s8 = scalar_select 0, %s7, %s5
  $region1: #{tpu_custom_call.1} parent=0
    #allocation2 [shape = 'u8[32768]{0}', space=vmem, size = 0x8000, scoped, tag = 'input window, operand 0, single buffered']
    #allocation3 [shape = 's32[1]{0}', space=sflag, size = 0x4, scoped, tag = 'scoped memory for tpu_custom_call.1']
    #allocation4 [shape = 's32[1]{0}', space=sflag, size = 0x4, scoped, tag = 'scoped memory for tpu_custom_call.1']
    #allocation5 [shape = 'u8[32768]{0}', space=vmem, size = 0x8000, scoped, tag = 'input window, operand 1, single buffered']
    #allocation6 [shape = 's32[1]{0}', space=sflag, size = 0x4, scoped, tag = 'scoped memory for tpu_custom_call.1']
    #allocation7 [shape = 'u8[32768]{0}', space=vmem, size = 0x8000, scoped, tag = 'input window, operand 2, single buffered']
    #allocation8 [shape = 'u8[32768]{0}', space=vmem, size = 0x8000, scoped, tag = 'output window, operand 0, single buffered']
    %9 = vsyncpa [#allocation3], 0
    %10 = vsyncpa [#allocation6], 0
    %11 = vsyncpa [#allocation4], 0
    // Predicated region
    $region2: #{tpu_custom_call.1} parent=1 // pred_check
      _
    $region3: #{tpu_custom_call.1} parent=1 // pred_check_branch
      %13 = sbr.rel (0) target = $region5
    $region4: #{tpu_custom_call.1} parent=1 // pred_region
      %15 = vsyncadd [#allocation3], 0
      %s16 = sshll.u32 %s0, 4
      %s17 = int_to_ptr.hbm [resolvable:$true] %s16
      %s18 = sshll.u32 [#allocation2], 4
      %s19 = int_to_ptr.vmem [resolvable:$true] %s18
      %24 = dma.hbm_to_vmem [thread:$0]  %s17, 1024, %s19, [#allocation3], 64, 64, 4
    $region5: #{tpu_custom_call.1} parent=1 // pred_fallthru
      _
    // Predicated region
    $region6: #{tpu_custom_call.1} parent=1 // pred_check
      _
    $region7: #{tpu_custom_call.1} parent=1 // pred_check_branch
      %26 = sbr.rel (0) target = $region9
    $region8: #{tpu_custom_call.1} parent=1 // pred_region
      %28 = vsyncadd [#allocation6], 0
      %s29 = sshll.u32 %s1, 4
      %s30 = int_to_ptr.hbm [resolvable:$true] %s29
      %s31 = sshll.u32 [#allocation5], 4
      %s32 = int_to_ptr.vmem [resolvable:$true] %s31
      %37 = dma.hbm_to_vmem [thread:$0]  %s30, 1024, %s32, [#allocation6], 64, 64, 4
    $region9: #{tpu_custom_call.1} parent=1 // pred_fallthru
      _
    // Predicated region
    $region10: #{tpu_custom_call.1} parent=1 // pred_check
      _
    $region11: #{tpu_custom_call.1} parent=1 // pred_check_branch
      %39 = sbr.rel (0) target = $region13
    $region12: #{tpu_custom_call.1} parent=1 // pred_region
      %41 = vsyncadd [#allocation6], 0
      %s42 = sshll.u32 %s2, 4
      %s43 = int_to_ptr.hbm [resolvable:$true] %s42
      %s44 = sshll.u32 [#allocation7], 4
      %s45 = int_to_ptr.vmem [resolvable:$true] %s44
      %50 = dma.hbm_to_vmem [thread:$0]  %s43, 1024, %s45, [#allocation6], 64, 64, 4
    $region13: #{tpu_custom_call.1} parent=1 // pred_fallthru
      _
    // Predicated region
    $region14: #{tpu_custom_call.1} parent=1 // pred_check
      _
    $region15: #{tpu_custom_call.1} parent=1 // pred_check_branch
      %52 = sbr.rel (0) target = $region17
    $region16: #{tpu_custom_call.1} parent=1 // pred_region
      _
    $region17: #{tpu_custom_call.1} parent=1 // pred_fallthru
      _
    // Predicated region
    $region18: #{tpu_custom_call.1} parent=1 // pred_check
      _
    $region19: #{tpu_custom_call.1} parent=1 // pred_check_branch
      %54 = sbr.rel (0) target = $region21
    $region20: #{tpu_custom_call.1} parent=1 // pred_region
      %56 = dma.done [#allocation3], 1024
    $region21: #{tpu_custom_call.1} parent=1 // pred_fallthru
      _
    // Predicated region
    $region22: #{tpu_custom_call.1} parent=1 // pred_check
      _
    $region23: #{tpu_custom_call.1} parent=1 // pred_check_branch
      %58 = sbr.rel (0) target = $region25
    $region24: #{tpu_custom_call.1} parent=1 // pred_region
      %60 = dma.done [#allocation6], 1024
    $region25: #{tpu_custom_call.1} parent=1 // pred_fallthru
      _
    // Predicated region
    $region26: #{tpu_custom_call.1} parent=1 // pred_check
      _
    $region27: #{tpu_custom_call.1} parent=1 // pred_check_branch
      %62 = sbr.rel (0) target = $region29
    $region28: #{tpu_custom_call.1} parent=1 // pred_region
      %64 = dma.done [#allocation6], 1024
    $region29: #{tpu_custom_call.1} parent=1 // pred_fallthru
      _
    %v65 = vld [vmem:[#allocation2] sm:$0xf]
    %v66 = vld [vmem:[#allocation2 + $0x4] sm:$0xf]
    %v67 = vld [vmem:[#allocation2 + $0x8] sm:$0xf]
    %v68 = vld [vmem:[#allocation2 + $0xc] sm:$0xf]
    %v69 = vld [vmem:[#allocation2 + $0x10] sm:$0xf]
    %v70 = vld [vmem:[#allocation2 + $0x14] sm:$0xf]
    %v71 = vld [vmem:[#allocation2 + $0x18] sm:$0xf]
    %v72 = vld [vmem:[#allocation2 + $0x1c] sm:$0xf]
    %v73 = vld [vmem:[#allocation2 + $0x20] sm:$0xf]
    %v74 = vld [vmem:[#allocation2 + $0x24] sm:$0xf]
    %v75 = vld [vmem:[#allocation2 + $0x28] sm:$0xf]
    %v76 = vld [vmem:[#allocation2 + $0x2c] sm:$0xf]
    %v77 = vld [vmem:[#allocation2 + $0x30] sm:$0xf]
    %v78 = vld [vmem:[#allocation2 + $0x34] sm:$0xf]
    %v79 = vld [vmem:[#allocation2 + $0x38] sm:$0xf]
    %v80 = vld [vmem:[#allocation2 + $0x3c] sm:$0xf]
    %v81 = vld [vmem:[#allocation5] sm:$0xf]
    %v82 = vld [vmem:[#allocation5 + $0x4] sm:$0xf]
    %v83 = vld [vmem:[#allocation5 + $0x8] sm:$0xf]
    %v84 = vld [vmem:[#allocation5 + $0xc] sm:$0xf]
    %v85 = vld [vmem:[#allocation5 + $0x10] sm:$0xf]
    %v86 = vld [vmem:[#allocation5 + $0x14] sm:$0xf]
    %v87 = vld [vmem:[#allocation5 + $0x18] sm:$0xf]
    %v88 = vld [vmem:[#allocation5 + $0x1c] sm:$0xf]
    %v89 = vld [vmem:[#allocation5 + $0x20] sm:$0xf]
    %v90 = vld [vmem:[#allocation5 + $0x24] sm:$0xf]
    %v91 = vld [vmem:[#allocation5 + $0x28] sm:$0xf]
    %v92 = vld [vmem:[#allocation5 + $0x2c] sm:$0xf]
    %v93 = vld [vmem:[#allocation5 + $0x30] sm:$0xf]
    %v94 = vld [vmem:[#allocation5 + $0x34] sm:$0xf]
    %v95 = vld [vmem:[#allocation5 + $0x38] sm:$0xf]
    %v96 = vld [vmem:[#allocation5 + $0x3c] sm:$0xf]
    %v113 = vunpack.c.l.b16 %v65
    %v114 = vunpack.c.l.b16 %v66
    %v115 = vunpack.c.l.b16 %v67
    %v116 = vunpack.c.l.b16 %v68
    %v117 = vunpack.c.l.b16 %v69
    %v118 = vunpack.c.l.b16 %v70
    %v119 = vunpack.c.l.b16 %v71
    %v120 = vunpack.c.l.b16 %v72
    %v121 = vunpack.c.l.b16 %v73
    %v122 = vunpack.c.l.b16 %v74
    %v123 = vunpack.c.l.b16 %v75
    %v124 = vunpack.c.l.b16 %v76
    %v125 = vunpack.c.l.b16 %v77
    %v126 = vunpack.c.l.b16 %v78
    %v127 = vunpack.c.l.b16 %v79
    %v128 = vunpack.c.l.b16 %v80
    %v129 = vpack.c.b16 %v114, %v113
    %v130 = vpack.c.b16 %v116, %v115
    %v131 = vpack.c.b16 %v118, %v117
    %v132 = vpack.c.b16 %v120, %v119
    %v133 = vpack.c.b16 %v122, %v121
    %v134 = vpack.c.b16 %v124, %v123
    %v135 = vpack.c.b16 %v126, %v125
    %v136 = vpack.c.b16 %v128, %v127
    %v161 = vunpack.c.l.b16 %v81
    %v162 = vunpack.c.l.b16 %v82
    %v163 = vunpack.c.l.b16 %v83
    %v164 = vunpack.c.l.b16 %v84
    %v165 = vunpack.c.l.b16 %v85
    %v166 = vunpack.c.l.b16 %v86
    %v167 = vunpack.c.l.b16 %v87
    %v168 = vunpack.c.l.b16 %v88
    %v169 = vunpack.c.l.b16 %v89
    %v170 = vunpack.c.l.b16 %v90
    %v171 = vunpack.c.l.b16 %v91
    %v172 = vunpack.c.l.b16 %v92
    %v173 = vunpack.c.l.b16 %v93
    %v174 = vunpack.c.l.b16 %v94
    %v175 = vunpack.c.l.b16 %v95
    %v176 = vunpack.c.l.b16 %v96
    %v177 = vpack.c.b16 %v162, %v161
    %v178 = vpack.c.b16 %v164, %v163
    %v179 = vpack.c.b16 %v166, %v165
    %v180 = vpack.c.b16 %v168, %v167
    %v181 = vpack.c.b16 %v170, %v169
    %v182 = vpack.c.b16 %v172, %v171
    %v183 = vpack.c.b16 %v174, %v173
    %v184 = vpack.c.b16 %v176, %v175
    %193 = vmatpush.bf16.msra.mxu0 %v184
    %194 = vmatpush.bf16.msra.mxu0 %v183
    %195 = vmatpush.bf16.msra.mxu0 %v182
    %196 = vmatpush.bf16.msra.mxu0 %v181
    %197 = vmatpush.bf16.msra.mxu0 %v180
    %198 = vmatpush.bf16.msra.mxu0 %v179
    %199 = vmatpush.bf16.msra.mxu0 %v178
    %200 = vmatpush.bf16.msra.mxu0 %v177
    %201 = vmatmul.bf16.gmra.mxu0 %v129
    %v202 = vpop.f32.mrf.mxu0
    %v203 = vadd.f32 0.0, %v202
    %v204 = vpop.f32.mrf.mxu0
    %v205 = vadd.f32 0.0, %v204
    %206 = vmatmul.bf16.gmra.mxu0 %v130
    %v207 = vpop.f32.mrf.mxu0
    %v208 = vadd.f32 0.0, %v207
    %v209 = vpop.f32.mrf.mxu0
    %v210 = vadd.f32 0.0, %v209
    %211 = vmatmul.bf16.gmra.mxu0 %v131
    %v212 = vpop.f32.mrf.mxu0
    %v213 = vadd.f32 0.0, %v212
    %v214 = vpop.f32.mrf.mxu0
    %v215 = vadd.f32 0.0, %v214
    %216 = vmatmul.bf16.gmra.mxu0 %v132
    %v217 = vpop.f32.mrf.mxu0
    %v218 = vadd.f32 0.0, %v217
    %v219 = vpop.f32.mrf.mxu0
    %v220 = vadd.f32 0.0, %v219
    %221 = vmatmul.bf16.gmra.mxu0 %v133
    %v222 = vpop.f32.mrf.mxu0
    %v223 = vadd.f32 0.0, %v222
    %v224 = vpop.f32.mrf.mxu0
    %v225 = vadd.f32 0.0, %v224
    %226 = vmatmul.bf16.gmra.mxu0 %v134
    %v227 = vpop.f32.mrf.mxu0
    %v228 = vadd.f32 0.0, %v227
    %v229 = vpop.f32.mrf.mxu0
    %v230 = vadd.f32 0.0, %v229
    %231 = vmatmul.bf16.gmra.mxu0 %v135
    %v232 = vpop.f32.mrf.mxu0
    %v233 = vadd.f32 0.0, %v232
    %v234 = vpop.f32.mrf.mxu0
    %v235 = vadd.f32 0.0, %v234
    %236 = vmatmul.bf16.gmra.mxu0 %v136
    %v237 = vpop.f32.mrf.mxu0
    %v238 = vadd.f32 0.0, %v237
    %v239 = vpop.f32.mrf.mxu0
    %v240 = vadd.f32 0.0, %v239
    %241 = vdwg.mxu0
    %v242 = vpack.c.bf16 %v205, %v203
    %v243 = vpack.c.bf16 %v210, %v208
    %v244 = vpack.c.bf16 %v215, %v213
    %v245 = vpack.c.bf16 %v220, %v218
    %v246 = vpack.c.bf16 %v225, %v223
    %v247 = vpack.c.bf16 %v230, %v228
    %v248 = vpack.c.bf16 %v235, %v233
    %v249 = vpack.c.bf16 %v240, %v238
    %v250 = vld [vmem:[#allocation7] sm:$0xf]
    %v251 = vld [vmem:[#allocation7 + $0x4] sm:$0xf]
    %v252 = vld [vmem:[#allocation7 + $0x8] sm:$0xf]
    %v253 = vld [vmem:[#allocation7 + $0xc] sm:$0xf]
    %v254 = vld [vmem:[#allocation7 + $0x10] sm:$0xf]
    %v255 = vld [vmem:[#allocation7 + $0x14] sm:$0xf]
    %v256 = vld [vmem:[#allocation7 + $0x18] sm:$0xf]
    %v257 = vld [vmem:[#allocation7 + $0x1c] sm:$0xf]
    %v258 = vld [vmem:[#allocation7 + $0x20] sm:$0xf]
    %v259 = vld [vmem:[#allocation7 + $0x24] sm:$0xf]
    %v260 = vld [vmem:[#allocation7 + $0x28] sm:$0xf]
    %v261 = vld [vmem:[#allocation7 + $0x2c] sm:$0xf]
    %v262 = vld [vmem:[#allocation7 + $0x30] sm:$0xf]
    %v263 = vld [vmem:[#allocation7 + $0x34] sm:$0xf]
    %v264 = vld [vmem:[#allocation7 + $0x38] sm:$0xf]
    %v265 = vld [vmem:[#allocation7 + $0x3c] sm:$0xf]
    %v266 = vld [vmem:[%s3] sm:$0x1]
    %v268 = vperm.slane %v266, 0
    %v286 = vunpack.c.l.b16 %v250
    %v287 = vunpack.c.l.b16 %v251
    %v288 = vunpack.c.l.b16 %v252
    %v289 = vunpack.c.l.b16 %v253
    %v290 = vunpack.c.l.b16 %v254
    %v291 = vunpack.c.l.b16 %v255
    %v292 = vunpack.c.l.b16 %v256
    %v293 = vunpack.c.l.b16 %v257
    %v294 = vunpack.c.l.b16 %v258
    %v295 = vunpack.c.l.b16 %v259
    %v296 = vunpack.c.l.b16 %v260
    %v297 = vunpack.c.l.b16 %v261
    %v298 = vunpack.c.l.b16 %v262
    %v299 = vunpack.c.l.b16 %v263
    %v300 = vunpack.c.l.b16 %v264
    %v301 = vunpack.c.l.b16 %v265
    %v302 = vpack.c.b16 %v287, %v286
    %v303 = vpack.c.b16 %v289, %v288
    %v304 = vpack.c.b16 %v291, %v290
    %v305 = vpack.c.b16 %v293, %v292
    %v306 = vpack.c.b16 %v295, %v294
    %v307 = vpack.c.b16 %v297, %v296
    %v308 = vpack.c.b16 %v299, %v298
    %v309 = vpack.c.b16 %v301, %v300
    %318 = vmatpush.bf16.msra.mxu0 %v309
    %319 = vmatpush.bf16.msra.mxu0 %v308
    %320 = vmatpush.bf16.msra.mxu0 %v307
    %321 = vmatpush.bf16.msra.mxu0 %v306
    %322 = vmatpush.bf16.msra.mxu0 %v305
    %323 = vmatpush.bf16.msra.mxu0 %v304
    %324 = vmatpush.bf16.msra.mxu0 %v303
    %325 = vmatpush.bf16.msra.mxu0 %v302
    %326 = vmatmul.bf16.gmra.mxu0 %v242
    %v327 = vpop.f32.mrf.mxu0
    %v328 = vadd.f32 %v268, %v327
    %v329 = vpop.f32.mrf.mxu0
    %v330 = vadd.f32 %v268, %v329
    %331 = vmatmul.bf16.gmra.mxu0 %v243
    %v332 = vpop.f32.mrf.mxu0
    %v333 = vadd.f32 %v268, %v332
    %v334 = vpop.f32.mrf.mxu0
    %v335 = vadd.f32 %v268, %v334
    %336 = vmatmul.bf16.gmra.mxu0 %v244
    %v337 = vpop.f32.mrf.mxu0
    %v338 = vadd.f32 %v268, %v337
    %v339 = vpop.f32.mrf.mxu0
    %v340 = vadd.f32 %v268, %v339
    %341 = vmatmul.bf16.gmra.mxu0 %v245
    %v342 = vpop.f32.mrf.mxu0
    %v343 = vadd.f32 %v268, %v342
    %v344 = vpop.f32.mrf.mxu0
    %v345 = vadd.f32 %v268, %v344
    %346 = vmatmul.bf16.gmra.mxu0 %v246
    %v347 = vpop.f32.mrf.mxu0
    %v348 = vadd.f32 %v268, %v347
    %v349 = vpop.f32.mrf.mxu0
    %v350 = vadd.f32 %v268, %v349
    %351 = vmatmul.bf16.gmra.mxu0 %v247
    %v352 = vpop.f32.mrf.mxu0
    %v353 = vadd.f32 %v268, %v352
    %v354 = vpop.f32.mrf.mxu0
    %v355 = vadd.f32 %v268, %v354
    %356 = vmatmul.bf16.gmra.mxu0 %v248
    %v357 = vpop.f32.mrf.mxu0
    %v358 = vadd.f32 %v268, %v357
    %v359 = vpop.f32.mrf.mxu0
    %v360 = vadd.f32 %v268, %v359
    %361 = vmatmul.bf16.gmra.mxu0 %v249
    %v362 = vpop.f32.mrf.mxu0
    %v363 = vadd.f32 %v268, %v362
    %v364 = vpop.f32.mrf.mxu0
    %v365 = vadd.f32 %v268, %v364
    %366 = vdwg.mxu0
    %v367 = vmul.f32 %v328, 0.01
    %v368 = vmul.f32 %v330, 0.01
    %v369 = vmul.f32 %v333, 0.01
    %v370 = vmul.f32 %v335, 0.01
    %v371 = vmul.f32 %v338, 0.01
    %v372 = vmul.f32 %v340, 0.01
    %v373 = vmul.f32 %v343, 0.01
    %v374 = vmul.f32 %v345, 0.01
    %v375 = vmul.f32 %v348, 0.01
    %v376 = vmul.f32 %v350, 0.01
    %v377 = vmul.f32 %v353, 0.01
    %v378 = vmul.f32 %v355, 0.01
    %v379 = vmul.f32 %v358, 0.01
    %v380 = vmul.f32 %v360, 0.01
    %v381 = vmul.f32 %v363, 0.01
    %v382 = vmul.f32 %v365, 0.01
    %v383 = vmax.f32 %v328, %v367
    %v384 = vmax.f32 %v330, %v368
    %v385 = vmax.f32 %v333, %v369
    %v386 = vmax.f32 %v335, %v370
    %v387 = vmax.f32 %v338, %v371
    %v388 = vmax.f32 %v340, %v372
    %v389 = vmax.f32 %v343, %v373
    %v390 = vmax.f32 %v345, %v374
    %v391 = vmax.f32 %v348, %v375
    %v392 = vmax.f32 %v350, %v376
    %v393 = vmax.f32 %v353, %v377
    %v394 = vmax.f32 %v355, %v378
    %v395 = vmax.f32 %v358, %v379
    %v396 = vmax.f32 %v360, %v380
    %v397 = vmax.f32 %v363, %v381
    %v398 = vmax.f32 %v365, %v382
    %v399 = vpack.c.bf16 %v383, %v383
    %v400 = vpack.c.bf16 %v384, %v384
    %v401 = vpack.c.bf16 %v385, %v385
    %v402 = vpack.c.bf16 %v386, %v386
    %v403 = vpack.c.bf16 %v387, %v387
    %v404 = vpack.c.bf16 %v388, %v388
    %v405 = vpack.c.bf16 %v389, %v389
    %v406 = vpack.c.bf16 %v390, %v390
    %v407 = vpack.c.bf16 %v391, %v391
    %v408 = vpack.c.bf16 %v392, %v392
    %v409 = vpack.c.bf16 %v393, %v393
    %v410 = vpack.c.bf16 %v394, %v394
    %v411 = vpack.c.bf16 %v395, %v395
    %v412 = vpack.c.bf16 %v396, %v396
    %v413 = vpack.c.bf16 %v397, %v397
    %v414 = vpack.c.bf16 %v398, %v398
    %415 = vst [vmem:[#allocation8] sm:$0xf] %v399
    %416 = vst [vmem:[#allocation8 + $0x4] sm:$0xf] %v400
    %417 = vst [vmem:[#allocation8 + $0x8] sm:$0xf] %v401
    %418 = vst [vmem:[#allocation8 + $0xc] sm:$0xf] %v402
    %419 = vst [vmem:[#allocation8 + $0x10] sm:$0xf] %v403
    %420 = vst [vmem:[#allocation8 + $0x14] sm:$0xf] %v404
    %421 = vst [vmem:[#allocation8 + $0x18] sm:$0xf] %v405
    %422 = vst [vmem:[#allocation8 + $0x1c] sm:$0xf] %v406
    %423 = vst [vmem:[#allocation8 + $0x20] sm:$0xf] %v407
    %424 = vst [vmem:[#allocation8 + $0x24] sm:$0xf] %v408
    %425 = vst [vmem:[#allocation8 + $0x28] sm:$0xf] %v409
    %426 = vst [vmem:[#allocation8 + $0x2c] sm:$0xf] %v410
    %427 = vst [vmem:[#allocation8 + $0x30] sm:$0xf] %v411
    %428 = vst [vmem:[#allocation8 + $0x34] sm:$0xf] %v412
    %429 = vst [vmem:[#allocation8 + $0x38] sm:$0xf] %v413
    %430 = vst [vmem:[#allocation8 + $0x3c] sm:$0xf] %v414
    // Predicated region
    $region30: #{tpu_custom_call.1} parent=1 // pred_check
      _
    $region31: #{tpu_custom_call.1} parent=1 // pred_check_branch
      %432 = sbr.rel (0) target = $region33
    $region32: #{tpu_custom_call.1} parent=1 // pred_region
      %434 = vsyncadd [#allocation4], 0
      %s435 = sshll.u32 [#allocation8], 4
      %s436 = int_to_ptr.vmem [resolvable:$true] %s435
      %s437 = sshll.u32 %s4, 4
      %s438 = int_to_ptr.hbm [resolvable:$true] %s437
      %443 = dma.vmem_to_hbm [thread:$0]  %s436, 1024, %s438, [#allocation4], 64, 64, 4
    $region33: #{tpu_custom_call.1} parent=1 // pred_fallthru
      _
    // Predicated region
    $region34: #{tpu_custom_call.1} parent=1 // pred_check
      _
    $region35: #{tpu_custom_call.1} parent=1 // pred_check_branch
      %445 = sbr.rel (0) target = $region37
    $region36: #{tpu_custom_call.1} parent=1 // pred_region
      %447 = dma.done [#allocation4], 1024
    $region37: #{tpu_custom_call.1} parent=1 // pred_fallthru
      _
    %448 = vsyncpa [#allocation3], 1
    %449 = vsyncpa [#allocation6], 1
    %450 = vsyncpa [#allocation4], 1

</llo_original>
